<compile_context>
chip_gen: v6e
topology: v6e:2x2x1
jax: 0.10.0
libtpu: 0.0.40
codegen_flags: <defaults>
</compile_context>

<pallas_src>
import jax
import jax.numpy as jnp
from jax.experimental import pallas as pl
from jax.experimental.pallas import tpu as pltpu

LANE = 128


def _round_up(x, m):
    return ((x + m - 1) // m) * m


def _sublane(dtype):
    # f32 -> 8, bf16 -> 16, int8/fp8 -> 32 (sub-32-bit dtypes pack sublanes).
    return 8 * max(1, 4 // jnp.dtype(dtype).itemsize)


def _pick_tile_bytes():
    """8 MiB tiles on 64 MiB-VMEM chips (v7x), 16 MiB on 128 MiB chips."""
    vmem = 64 << 20
    try:
        info = pltpu.get_tpu_info()
        vmem = int(getattr(info, "vmem_capacity_bytes", vmem))
    except Exception:
        pass
    return (16 << 20) if vmem >= (100 << 20) else (8 << 20)


def _svi_kernel(lm_ref, params_ref, out_ref):
    # Per-row parameter prep stays on the skinny (block_b, 1) slab; each
    # lane-broadcast into the wide domain happens exactly once.
    p = params_ref[...].astype(jnp.float32)          # (block_b, 5)
    a = p[:, 0:1]
    b = jnp.maximum(p[:, 1:2], 1e-6)
    rho = jnp.clip(p[:, 2:3], -1.0 + 1e-6, 1.0 - 1e-6)
    m = p[:, 3:4]
    sigma = jnp.maximum(p[:, 4:5], 1e-6)
    sigma2 = sigma * sigma
    brho = b * rho                                   # hoisted off the wide domain

    # Wide domain: ~7 VALU ops + 1 EUP sqrt per element.
    lm = lm_ref[...].astype(jnp.float32)             # (block_b, block_n)
    x = lm - m
    term2 = jnp.sqrt(x * x + sigma2)                 # EUP slot (free vs VALU)
    out_ref[...] = (a + brho * x + b * term2).astype(out_ref.dtype)


def svi_forward(log_moneyness, params, *, tile_bytes=None, max_block_n=2048):
    """Pallas equivalent of RegularizedSVIModel.forward.

    Args:
      log_moneyness: (B, N) float array.
      params:        (B, 5) float array, columns [a, b, rho, m, sigma].
    Returns:
      (B, N) total variance, same dtype as log_moneyness.
    """
    B, N = log_moneyness.shape
    dtype = log_moneyness.dtype
    itemsize = jnp.dtype(dtype).itemsize
    sub = _sublane(dtype)

    if tile_bytes is None:
        tile_bytes = _pick_tile_bytes()

    # ---- tile geometry ------------------------------------------------------
    # Lane-dense N blocking: multiple of 128 so wide-domain stores are unmasked.
    block_n = min(_round_up(N, LANE), max_block_n)
    # Fill the per-step tile byte budget with batch rows (sublane multiple).
    rows = max(sub, (tile_bytes // (block_n * itemsize)) // sub * sub)
    block_b = min(rows, _round_up(B, sub))

    # Keep the total grid >= 2 steps (pipeline overlap / both v7x cores), but
    # never shrink tiles when one axis already supplies enough blocks.  Prefer
    # splitting along N (keeps 128-multiples) before shrinking block_b.
    def _nblocks():
        return pl.cdiv(B, block_b) * pl.cdiv(N, block_n)

    while _nblocks() < 2 and block_n > LANE:
        block_n = max(LANE, _round_up(block_n // 2, LANE))
    while _nblocks() < 2 and block_b > sub:
        block_b = max(sub, _round_up(block_b // 2, sub))

    grid = (pl.cdiv(B, block_b), pl.cdiv(N, block_n))

    # Double-buffered input + output tiles (4x) + params + headroom.
    vmem_limit = min(int(4 * block_b * block_n * itemsize) + (8 << 20), 100 << 20)

    return pl.pallas_call(
        _svi_kernel,
        out_shape=jax.ShapeDtypeStruct((B, N), dtype),
        grid_spec=pltpu.PrefetchScalarGridSpec(
            num_scalar_prefetch=0,
            grid=grid,
            in_specs=[
                # Streaming log-moneyness tile (partial edge blocks handled by
                # Pallas; writeback clipped to the real extent).
                pl.BlockSpec((block_b, block_n), lambda i, j: (i, j)),
                # Per-batch-block params; j is the inner axis so this block is
                # not re-fetched while sweeping N.
                pl.BlockSpec((block_b, 5), lambda i, j: (i, 0)),
            ],
            out_specs=pl.BlockSpec((block_b, block_n), lambda i, j: (i, j)),
        ),
        compiler_params=pltpu.CompilerParams(
            dimension_semantics=("parallel", "parallel"),
            vmem_limit_bytes=vmem_limit,
        ),
    )(log_moneyness, params)


def svi_forward_ref(log_moneyness, params):
    """Pure-JAX reference mirroring the PyTorch forward exactly."""
    a, b, rho, m, sigma = [params[:, i] for i in range(5)]
    b = jnp.clip(b, 1e-6, None)
    rho = jnp.clip(rho, -1.0 + 1e-6, 1.0 - 1e-6)
    sigma = jnp.clip(sigma, 1e-6, None)
    x = log_moneyness - m[:, None]
    term1 = rho[:, None] * x
    term2 = jnp.sqrt(x ** 2 + sigma[:, None] ** 2)
    return a[:, None] + b[:, None] * (term1 + term2)


# TODO(synk): fit() (Adam loop, GradScaler, per-maturity regularization) is
# host-side training logic and is intentionally not translated; only forward()
# is a kernel.

if __name__ == "__main__":
    key = jax.random.PRNGKey(0)
    k_lm, k_p = jax.random.split(key)

    # Small, non-aligned shapes to exercise the partial-block (cdiv) paths:
    # 12 maturities, 200 points per maturity.
    B, N = 12, 200

    log_moneyness = 0.3 * jax.random.normal(k_lm, (B, N), dtype=jnp.float32)

    # Deterministic params: the module's fit() init [0.05, 0.2, 0.0, 0.0, 0.1]
    # plus a small perturbation so rows differ.
    base = jnp.array([0.05, 0.2, 0.0, 0.0, 0.1], dtype=jnp.float32)
    params = base[None, :] + 0.01 * jax.random.normal(k_p, (B, 5), dtype=jnp.float32)

    out = svi_forward(log_moneyness, params)
    out = jax.block_until_ready(out)

    ref = svi_forward_ref(log_moneyness, params)
    assert out.shape == (B, N) and out.dtype == jnp.float32
    assert bool(jnp.all(jnp.isfinite(out)))
    assert jnp.allclose(out, ref, atol=1e-5, rtol=1e-5), "mismatch vs reference"

    print("KERNEL_OK")
</pallas_src>

<mosaic_0001>
module attributes {stable_mosaic.version = 11 : i64} {
  func.func @_svi_kernel(%arg0: i32, %arg1: i32, %arg2: memref<16x128xf32, #tpu.memory_space<vmem>>, %arg3: memref<16x5xf32, #tpu.memory_space<vmem>>, %arg4: memref<16x128xf32, #tpu.memory_space<vmem>>) attributes {dimension_semantics = [#tpu.dimension_semantics<parallel>, #tpu.dimension_semantics<parallel>], iteration_bounds = array<i64: 1, 2>, scalar_prefetch = 0 : i64, scratch_operands = 0 : i64, tpu.core_type = #tpu.core_type<tc>, window_params = [{transform_indices = @transform_0, window_bounds = array<i64: 16, 128>}, {transform_indices = @transform_1, window_bounds = array<i64: 16, 5>}, {transform_indices = @transform_2, window_bounds = array<i64: 16, 128>}]} {
    %c0 = arith.constant 0 : index
    %c0_0 = arith.constant 0 : index
    %0 = vector.load %arg3[%c0, %c0_0] : memref<16x5xf32, #tpu.memory_space<vmem>>, vector<16x5xf32>
    %1 = vector.extract_strided_slice %0 {offsets = [0, 0], sizes = [16, 1], strides = [1, 1]} : vector<16x5xf32> to vector<16x1xf32>
    %2 = vector.extract_strided_slice %0 {offsets = [0, 1], sizes = [16, 1], strides = [1, 1]} : vector<16x5xf32> to vector<16x1xf32>
    %cst = arith.constant 9.99999997E-7 : f32
    %3 = vector.broadcast %cst : f32 to vector<16x1xf32>
    %4 = arith.maximumf %2, %3 : vector<16x1xf32>
    %5 = vector.extract_strided_slice %0 {offsets = [0, 2], sizes = [16, 1], strides = [1, 1]} : vector<16x5xf32> to vector<16x1xf32>
    %cst_1 = arith.constant -0.999998986 : f32
    %cst_2 = arith.constant 0.999998986 : f32
    %6 = vector.broadcast %cst_1 : f32 to vector<16x1xf32>
    %7 = arith.maximumf %6, %5 : vector<16x1xf32>
    %8 = vector.broadcast %cst_2 : f32 to vector<16x1xf32>
    %9 = arith.minimumf %8, %7 : vector<16x1xf32>
    %10 = vector.extract_strided_slice %0 {offsets = [0, 3], sizes = [16, 1], strides = [1, 1]} : vector<16x5xf32> to vector<16x1xf32>
    %11 = vector.extract_strided_slice %0 {offsets = [0, 4], sizes = [16, 1], strides = [1, 1]} : vector<16x5xf32> to vector<16x1xf32>
    %cst_3 = arith.constant 9.99999997E-7 : f32
    %12 = vector.broadcast %cst_3 : f32 to vector<16x1xf32>
    %13 = arith.maximumf %11, %12 : vector<16x1xf32>
    %14 = arith.mulf %13, %13 : vector<16x1xf32>
    %15 = arith.mulf %4, %9 : vector<16x1xf32>
    %c0_4 = arith.constant 0 : index
    %c0_5 = arith.constant 0 : index
    %16 = vector.load %arg2[%c0_4, %c0_5] : memref<16x128xf32, #tpu.memory_space<vmem>>, vector<16x128xf32>
    %17 = vector.broadcast %10 : vector<16x1xf32> to vector<16x128xf32>
    %18 = arith.subf %16, %17 : vector<16x128xf32>
    %19 = arith.mulf %18, %18 : vector<16x128xf32>
    %20 = vector.broadcast %14 : vector<16x1xf32> to vector<16x128xf32>
    %21 = arith.addf %19, %20 : vector<16x128xf32>
    %22 = math.sqrt %21 : vector<16x128xf32>
    %23 = vector.broadcast %15 : vector<16x1xf32> to vector<16x128xf32>
    %24 = arith.mulf %23, %18 : vector<16x128xf32>
    %25 = vector.broadcast %1 : vector<16x1xf32> to vector<16x128xf32>
    %26 = arith.addf %25, %24 : vector<16x128xf32>
    %27 = vector.broadcast %4 : vector<16x1xf32> to vector<16x128xf32>
    %28 = arith.mulf %27, %22 : vector<16x128xf32>
    %29 = arith.addf %26, %28 : vector<16x128xf32>
    %c0_6 = arith.constant 0 : index
    %c0_7 = arith.constant 0 : index
    %30 = vector.load %arg4[%c0_6, %c0_7] : memref<16x128xf32, #tpu.memory_space<vmem>>, vector<16x128xf32>
    tpu.vector_store %arg4[%c0_6, %c0_7], %29 {strides = array<i32>} : memref<16x128xf32, #tpu.memory_space<vmem>>, vector<16x128xf32>,
    return
  }
  func.func @transform_0(%arg0: i32, %arg1: i32) -> (i32, i32) {
    %c0_i32 = arith.constant 0 : i32
    return %arg0, %arg1 : i32, i32
  }
  func.func @transform_1(%arg0: i32, %arg1: i32) -> (i32, i32) {
    %c0_i32 = arith.constant 0 : i32
    %c0_i32_0 = arith.constant 0 : i32
    return %arg0, %c0_i32 : i32, i32
  }
  func.func @transform_2(%arg0: i32, %arg1: i32) -> (i32, i32) {
    %c0_i32 = arith.constant 0 : i32
    return %arg0, %arg1 : i32, i32
  }
}

</mosaic_0001>

<llo_original>
// kernel: tpu_custom_call.1
$region0: #{tpu_custom_call.1}
  #allocation0 [shape = 'u32[]', space=smem, size = 0x4, offset = 0x4, fixed_abs, tag = 'smem constant byte address 0x4 - core index']
  #allocation1 [shape = 'u32[144,128]{1,0:T(1,128)}', space=vmem, size = 0x12000, scoped, tag = 'internal scratch']
  %s0 = inlined_call_operand.hbm [shape: f32[12,200], index: 0, kind: input, shape index: {}]
  %s1 = inlined_call_operand.vmem [shape: f32[12,5], index: 1, kind: input, shape index: {}]
  %s2 = inlined_call_operand.hbm [shape: f32[12,200], index: 2, kind: output, shape index: {}]
  %s3 = sld [smem:[#allocation0]]
  $region45: #{tpu_custom_call.1} parent=0
    _
  %s5 = ssub.s32 1, %s3
  %s6 = scalar_select 0, %s5, %s3
  $region1: #{tpu_custom_call.1} parent=0
    #allocation2 [shape = 'u8[16384]{0}', space=vmem, size = 0x4000, scoped, tag = 'input window, operand 0']
    #allocation3 [shape = 's32[2]{0}', space=sflag, size = 0x8, scoped, tag = 'scoped memory for tpu_custom_call.1']
    #allocation4 [shape = 's32[2]{0}', space=sflag, size = 0x8, scoped, tag = 'scoped memory for tpu_custom_call.1']
    #allocation5 [shape = 'u8[16384]{0}', space=vmem, size = 0x4000, scoped, tag = 'output window, operand 0']
    %7 = vsyncpa [#allocation3], 0
    %s8 = scalar_lea.sflag [#allocation3], 1
    %9 = vsyncpa %s8, 0
    %10 = vsyncpa [#allocation4], 0
    %s11 = scalar_lea.sflag [#allocation4], 1
    %12 = vsyncpa %s11, 0
    loop: start=0, step=1, limit=4
    $region2: #{tpu_custom_call.1} parent=1 // loop_pre_header
      _
    $region3: #{tpu_custom_call.1} parent=1 // loop_header
      %s14 = sphi 0, %s18
      %p15 = scmp.ge.s32.totalorder %s14, 4
      %s21 = sphi 0, %s33
      %s22 = sphi 0, %s29
      %s23 = sphi 0, %s21
      %s24 = sphi 0, %s22
      %s25 = sphi 0, %s23
      %s26 = sphi 0, %s24
      %s38 = sphi 0, %s40
      %s41 = sphi 0, %s38
      %s42 = sphi 0, %s41
      %s58 = sphi 0, %s42
      %s64 = sphi 0, %s66
      %s67 = sphi 0, %s64
      %s68 = sphi 0, %s67
      %s84 = sphi 0, %s68
      %s92 = sphi 0, %s94
      %s95 = sphi 0, %s92
      %s96 = sphi 0, %s95
      %s112 = sphi 0, %s96
    $region4: #{tpu_custom_call.1} parent=1 // loop_header_branch
      %17 = sbr.rel (%p15) target = $region8
    $region5: #{tpu_custom_call.1} parent=1 // loop_body
      %s19 = ssub.s32 %s14, 1
      %s20 = ssub.s32 %s14, 2
      %s27 = sadd.s32 1, %s22
      %p28 = scmp.ge.s32.totalorder %s27, 2
      %s29 = scalar_select %p28, 0, %s27
      %s30 = sadd.s32 1, %s21
      %s31 = scalar_select %p28, %s30, %s21
      %p32 = scmp.ge.s32.totalorder %s31, 1
      %s33 = scalar_select %p32, 0, %s31
      %s34 = ssub.s32 %s21, %s33
      %s35 = ssub.s32 %s22, %s29
      %s36 = sor.u32 %s34, %s35
      %p37 = scmp.eq.s32.totalorder %s36, 0
      %s39 = sadd.s32 %s38, 1
      %s40 = scalar_select %p37, %s38, %s39
      %p43 = pneg %p37
      %p44 = scmp.eq.s32.totalorder %s14, 1
      %p45 = por %p43, %p44
      %p46 = scmp.ne.s32.totalorder %s38, %s41
      %p47 = scmp.eq.s32.totalorder %s14, 0
      %p48 = por %p46, %p47
      %p49 = scmp.ne.s32.totalorder %s38, %s41
      %p50 = scmp.eq.s32.totalorder %s19, 1
      %p51 = por %p49, %p50
      %p52 = scmp.ne.s32.totalorder %s41, %s42
      %p53 = scmp.eq.s32.totalorder %s19, 0
      %p54 = por %p52, %p53
      %p55 = scmp.ne.s32.totalorder %s41, %s42
      %p56 = scmp.eq.s32.totalorder %s20, 1
      %p57 = por %p55, %p56
      %p59 = scmp.ne.s32.totalorder %s42, %s58
      %p60 = scmp.eq.s32.totalorder %s20, 0
      %p61 = por %p59, %p60
      %s62 = ssub.s32 %s21, %s33
      %p63 = scmp.eq.s32.totalorder %s62, 0
      %s65 = sadd.s32 %s64, 1
      %s66 = scalar_select %p63, %s64, %s65
      %p69 = pneg %p63
      %p70 = scmp.eq.s32.totalorder %s14, 1
      %p71 = por %p69, %p70
      %p72 = scmp.ne.s32.totalorder %s64, %s67
      %p73 = scmp.eq.s32.totalorder %s14, 0
      %p74 = por %p72, %p73
      %p75 = scmp.ne.s32.totalorder %s64, %s67
      %p76 = scmp.eq.s32.totalorder %s19, 1
      %p77 = por %p75, %p76
      %p78 = scmp.ne.s32.totalorder %s67, %s68
      %p79 = scmp.eq.s32.totalorder %s19, 0
      %p80 = por %p78, %p79
      %p81 = scmp.ne.s32.totalorder %s67, %s68
      %p82 = scmp.eq.s32.totalorder %s20, 1
      %p83 = por %p81, %p82
      %p85 = scmp.ne.s32.totalorder %s68, %s84
      %p86 = scmp.eq.s32.totalorder %s20, 0
      %p87 = por %p85, %p86
      %s88 = ssub.s32 %s21, %s33
      %s89 = ssub.s32 %s22, %s29
      %s90 = sor.u32 %s88, %s89
      %p91 = scmp.eq.s32.totalorder %s90, 0
      %s93 = sadd.s32 %s92, 1
      %s94 = scalar_select %p91, %s92, %s93
      %p97 = pneg %p91
      %p98 = scmp.eq.s32.totalorder %s14, 1
      %p99 = por %p97, %p98
      %p100 = scmp.ne.s32.totalorder %s92, %s95
      %p101 = scmp.eq.s32.totalorder %s14, 0
      %p102 = por %p100, %p101
      %p103 = scmp.ne.s32.totalorder %s92, %s95
      %p104 = scmp.eq.s32.totalorder %s19, 1
      %p105 = por %p103, %p104
      %p106 = scmp.ne.s32.totalorder %s95, %s96
      %p107 = scmp.eq.s32.totalorder %s19, 0
      %p108 = por %p106, %p107
      %p109 = scmp.ne.s32.totalorder %s95, %s96
      %p110 = scmp.eq.s32.totalorder %s20, 1
      %p111 = por %p109, %p110
      %p113 = scmp.ne.s32.totalorder %s96, %s112
      %p114 = scmp.eq.s32.totalorder %s20, 0
      %p115 = por %p113, %p114
      %p116 = scmp.le.s32.totalorder 1, %s14
      %p117 = scmp.lt.s32.totalorder %s14, 3
      %p118 = pnand %p116, %p117
      %p119 = pneg %p118
      // Predicated region
      $region9: #{tpu_custom_call.1} parent=5 // pred_check
        _
      $region10: #{tpu_custom_call.1} parent=5 // pred_check_branch
        %121 = sbr.rel (%p118) target = $region12
      $region11: #{tpu_custom_call.1} parent=5 // pred_region
        %s122 = ssub.s32 %s14, 1
        // Predicated region
        $region13: #{tpu_custom_call.1} parent=11 // pred_check
          %p123 = pneg %p80
        $region14: #{tpu_custom_call.1} parent=11 // pred_check_branch
          %125 = sbr.rel (%p123) target = $region16
        $region15: #{tpu_custom_call.1} parent=11 // pred_region
          %s126 = smul.u32 2, %s23
          %p127 = scmp.lt.s32.totalorder %s126, 1
          %s128 = scalar_select %p127, %s126, 1
          %s129 = smul.addr %s128, 8
          %s130 = scalar_lea.vmem %s1, %s129
          %s131 = smul.u32 2, %s23
        $region16: #{tpu_custom_call.1} parent=11 // pred_fallthru
          _
      $region12: #{tpu_custom_call.1} parent=5 // pred_fallthru
        _
      %p132 = scmp.lt.s32.totalorder %s14, 2
      // Predicated region
      $region17: #{tpu_custom_call.1} parent=5 // pred_check
        %p133 = pneg %p132
      $region18: #{tpu_custom_call.1} parent=5 // pred_check_branch
        %135 = sbr.rel (%p133) target = $region20
      $region19: #{tpu_custom_call.1} parent=5 // pred_region
        // Predicated region
        $region21: #{tpu_custom_call.1} parent=19 // pred_check
          %p136 = pneg %p48
        $region22: #{tpu_custom_call.1} parent=19 // pred_check_branch
          %138 = sbr.rel (%p136) target = $region24
        $region23: #{tpu_custom_call.1} parent=19 // pred_region
          %s139 = sand.u32 %s38, 1
          %s140 = scalar_lea.sflag [#allocation3], %s139
          %s141 = sand.u32 %s38, 1
          %s142 = smul.addr %s141, 16
          %s143 = scalar_lea.vmem [#allocation2], %s142
          %s144 = smul.u32 2, %s21
          %s146 = ssub.s32 256, 256
          %147 = vsyncadd %s140, %s146
          %s148 = smul.addr %s144, 2
          %s149 = sadd.s32 %s22, %s148
          %s150 = smul.addr %s149, 128
          %s151 = scalar_lea.hbm %s0, %s150
          %s152 = sshll.u32 %s143, 4
          %s153 = int_to_ptr.vmem [resolvable:$true] %s152
          %158 = dma.hbm_to_vmem [thread:$0]  %s151, 256, %s153, %s140, 256, 128, 8
        $region24: #{tpu_custom_call.1} parent=19 // pred_fallthru
          _
      $region20: #{tpu_custom_call.1} parent=5 // pred_fallthru
        _
      %p159 = scmp.le.s32.totalorder 1, %s14
      %p160 = scmp.lt.s32.totalorder %s14, 3
      %p161 = pnand %p159, %p160
      %p162 = pneg %p161
      // Predicated region
      $region25: #{tpu_custom_call.1} parent=5 // pred_check
        _
      $region26: #{tpu_custom_call.1} parent=5 // pred_check_branch
        %164 = sbr.rel (%p161) target = $region28
      $region27: #{tpu_custom_call.1} parent=5 // pred_region
        %s165 = ssub.s32 %s14, 1
        %s166 = sand.u32 %s41, 1
        %s167 = scalar_lea.sflag [#allocation3], %s166
        %s168 = sand.u32 %s41, 1
        %s169 = smul.addr %s168, 16
        %s170 = scalar_lea.vmem [#allocation2], %s169
        // Predicated region
        $region29: #{tpu_custom_call.1} parent=27 // pred_check
          %p171 = pneg %p54
        $region30: #{tpu_custom_call.1} parent=27 // pred_check_branch
          %173 = sbr.rel (%p171) target = $region32
        $region31: #{tpu_custom_call.1} parent=27 // pred_region
          %174 = dma.done %s167, 256
        $region32: #{tpu_custom_call.1} parent=27 // pred_fallthru
          _
        %s175 = sand.u32 %s41, 1
        %s176 = scalar_lea.sflag [#allocation3], %s175
        %s177 = sand.u32 %s41, 1
        %s178 = smul.addr %s177, 16
        %s179 = scalar_lea.vmem [#allocation2], %s178
        %p180 = pneg %p54
        %p181 = pneg %p51
        %s182 = smul.u32 2, %s23
        %p183 = scmp.lt.s32.totalorder %s182, 1
        %s184 = scalar_select %p183, %s182, 1
        %s185 = smul.addr %s184, 8
        %s186 = scalar_lea.vmem %s1, %s185
        %p187 = pneg %p80
        %p188 = pneg %p77
        %p189 = pneg %p108
        %p190 = pneg %p105
        %s191 = sand.u32 %s95, 1
        %s192 = scalar_lea.sflag [#allocation4], %s191
        %s193 = sand.u32 %s95, 1
        %s194 = smul.addr %s193, 16
        %s195 = scalar_lea.vmem [#allocation5], %s194
        %s196 = smul.u32 2, %s23
        %s197 = smul.u32 2, %s23
        %p198 = scmp.lt.s32.totalorder %s197, 1
        %s199 = scalar_select %p198, %s197, 1
        %s200 = smul.addr %s199, 8
        %s201 = scalar_lea.vmem %s1, %s200
        %s202 = smul.u32 2, %s23
        %s203 = smul.u32 2, %s23
        %v204 = vld [vmem:[%s201] sm:$0xff]
        %v205 = vld [vmem:[%s201 + $0x8] sm:$0xff]
        %v206 = vmax.f32 %v204, 1e-06
        %v207 = vmax.f32 %v205, 1e-06
        %v208 = vmax.f32 %v204, -0.999999
        %v209 = vmax.f32 %v205, -0.999999
        %v210 = vmin.f32 %v208, 0.999999
        %v211 = vmin.f32 %v209, 0.999999
        %v212 = vmul.f32 %v206, %v206
        %v213 = vmul.f32 %v207, %v207
        %216 = vrot.lane.b32.xlu0 %v210, 127
        %v217 = vpop.permute.xlu0 %216
        %218 = vrot.lane.b32.xlu0 %v211, 127
        %v219 = vpop.permute.xlu0 %218
        %v222 = vmul.f32 %v206, %v217
        %v223 = vmul.f32 %v207, %v219
        %v224 = vld [vmem:[%s170] sm:$0xff]
        %v225 = vld [vmem:[%s170 + $0x8] sm:$0xff]
        %227 = vset.pattern.permute.xlu0 3
        %228 = vperm.xlu0 %227, %v204
        %v229 = vpop.permute.xlu0 %228
        %232 = vset.pattern.permute.xlu0 3
        %233 = vperm.xlu0 %232, %v205
        %v234 = vpop.permute.xlu0 %233
        %v236 = vsub.f32 %v224, %v229
        %v237 = vsub.f32 %v225, %v234
        %v238 = vmul.f32 %v236, %v236
        %v239 = vmul.f32 %v237, %v237
        %241 = vset.pattern.permute.xlu0 4
        %242 = vperm.xlu0 %241, %v212
        %v243 = vpop.permute.xlu0 %242
        %246 = vset.pattern.permute.xlu0 4
        %247 = vperm.xlu0 %246, %v213
        %v248 = vpop.permute.xlu0 %247
        %v250 = vadd.f32 %v238, %v243
        %v251 = vadd.f32 %v239, %v248
        %v252 = vrsqrt.pop %v250
        %v253 = vmul.f32 %v250, %v252
        %vm254 = vcmp.eq.f32.partialorder %v250, inf
        %v255 = vsel %vm254, %v250, %v253
        %vm256 = vcmp.eq.f32.partialorder %v250, 0.0
        %v257 = vand.u32 %v250, 2147483648
        %v258 = vsel %vm256, %v257, %v255
        %v259 = vrsqrt.pop %v251
        %v260 = vmul.f32 %v251, %v259
        %vm261 = vcmp.eq.f32.partialorder %v251, inf
        %v262 = vsel %vm261, %v251, %v260
        %vm263 = vcmp.eq.f32.partialorder %v251, 0.0
        %v264 = vand.u32 %v251, 2147483648
        %v265 = vsel %vm263, %v264, %v262
        %267 = vset.pattern.permute.xlu0 1
        %268 = vperm.xlu0 %267, %v222
        %v269 = vpop.permute.xlu0 %268
        %272 = vset.pattern.permute.xlu0 1
        %273 = vperm.xlu0 %272, %v223
        %v274 = vpop.permute.xlu0 %273
        %v276 = vmul.f32 %v269, %v236
        %v277 = vmul.f32 %v274, %v237
        %278 = vset.pattern.permute.xlu0 0
        %279 = vperm.xlu0 %278, %v204
        %v280 = vpop.permute.xlu0 %279
        %282 = vset.pattern.permute.xlu0 0
        %283 = vperm.xlu0 %282, %v205
        %v284 = vpop.permute.xlu0 %283
        %v286 = vadd.f32 %v280, %v276
        %v287 = vadd.f32 %v284, %v277
        %289 = vset.pattern.permute.xlu0 1
        %290 = vperm.xlu0 %289, %v206
        %v291 = vpop.permute.xlu0 %290
        %294 = vset.pattern.permute.xlu0 1
        %295 = vperm.xlu0 %294, %v207
        %v296 = vpop.permute.xlu0 %295
        %v298 = vmul.f32 %v291, %v258
        %v299 = vmul.f32 %v296, %v265
        %v300 = vadd.f32 %v286, %v298
        %v301 = vadd.f32 %v287, %v299
        %302 = vst [vmem:[%s195] sm:$0xff] %v300
        %303 = vst [vmem:[%s195 + $0x8] sm:$0xff] %v301
        %s304 = sand.u32 %s95, 1
        %s305 = scalar_lea.sflag [#allocation4], %s304
        %s306 = sand.u32 %s95, 1
        %s307 = smul.addr %s306, 16
        %s308 = scalar_lea.vmem [#allocation5], %s307
        // Predicated region
        $region33: #{tpu_custom_call.1} parent=27 // pred_check
          %p309 = pneg %p105
        $region34: #{tpu_custom_call.1} parent=27 // pred_check_branch
          %311 = sbr.rel (%p309) target = $region36
        $region35: #{tpu_custom_call.1} parent=27 // pred_region
          %s312 = smul.u32 2, %s23
          %s314 = ssub.s32 256, 256
          %315 = vsyncadd %s305, %s314
          %s316 = smul.addr %s312, 2
          %s317 = sadd.s32 %s24, %s316
          %s318 = smul.addr %s317, 128
          %s319 = scalar_lea.hbm %s2, %s318
          %s320 = sshll.u32 %s308, 4
          %s321 = int_to_ptr.vmem [resolvable:$true] %s320
          %326 = dma.vmem_to_hbm [thread:$0]  %s321, 256, %s319, %s305, 128, 256, 8
        $region36: #{tpu_custom_call.1} parent=27 // pred_fallthru
          _
      $region28: #{tpu_custom_call.1} parent=5 // pred_fallthru
        _
      %p327 = scmp.le.s32.totalorder 2, %s14
      // Predicated region
      $region37: #{tpu_custom_call.1} parent=5 // pred_check
        %p328 = pneg %p327
      $region38: #{tpu_custom_call.1} parent=5 // pred_check_branch
        %330 = sbr.rel (%p328) target = $region40
      $region39: #{tpu_custom_call.1} parent=5 // pred_region
        %s331 = ssub.s32 %s14, 2
        // Predicated region
        $region41: #{tpu_custom_call.1} parent=39 // pred_check
          %p332 = pneg %p111
        $region42: #{tpu_custom_call.1} parent=39 // pred_check_branch
          %334 = sbr.rel (%p332) target = $region44
        $region43: #{tpu_custom_call.1} parent=39 // pred_region
          %s335 = sand.u32 %s96, 1
          %s336 = scalar_lea.sflag [#allocation4], %s335
          %s337 = sand.u32 %s96, 1
          %s338 = smul.addr %s337, 16
          %s339 = scalar_lea.vmem [#allocation5], %s338
          %340 = dma.done %s336, 256
        $region44: #{tpu_custom_call.1} parent=39 // pred_fallthru
          _
      $region40: #{tpu_custom_call.1} parent=5 // pred_fallthru
        _
    $region6: #{tpu_custom_call.1} parent=1 // loop_footer
      %s18 = sadd.s32 1, %s14
    $region7: #{tpu_custom_call.1} parent=1 // loop_footer_branch
      %13 = sbr.rel target = $region3
    $region8: #{tpu_custom_call.1} parent=1 // loop_exit
      _
    %341 = vsyncpa [#allocation3], 1
    %s342 = scalar_lea.sflag [#allocation3], 1
    %343 = vsyncpa %s342, 1
    %344 = vsyncpa [#allocation4], 1
    %s345 = scalar_lea.sflag [#allocation4], 1
    %346 = vsyncpa %s345, 1

</llo_original>
